<compile_context>
chip_gen: v5e
topology: v5e:2x2
jax: 0.10.0
libtpu: 0.0.40
codegen_flags: <defaults>
</compile_context>

<pallas_src>
import jax
import jax.numpy as jnp
from jax.experimental import pallas as pl
from jax.experimental.pallas import tpu as pltpu


def lstm_cell_kernel(x_ref, h_ref, c_ref, wg_ref, bg_ref, wout_ref, bout_ref,
                     out_ref, h_out_ref, c_out_ref):
    H = c_ref.shape[1]

    x = x_ref[...]          # (B, I)
    h_prev = h_ref[...]     # (B, H)
    c_prev = c_ref[...]     # (B, H)

    # Single fused gate projection: one K=(H+I) MXU push, N=4H=128 lanes.
    combined = jnp.concatenate([h_prev, x], axis=1)            # (B, H+I)
    gates = (jnp.dot(combined, wg_ref[...],
                     preferred_element_type=jnp.float32)
             + bg_ref[...])                                     # (B, 4H)

    # Two full-vreg EUP pushes instead of four sliced activations.
    sig = jax.nn.sigmoid(gates)
    tnh = jnp.tanh(gates)

    f_t = sig[:, 0 * H:1 * H]
    i_t = sig[:, 1 * H:2 * H]
    c_tilde = tnh[:, 2 * H:3 * H]
    o_t = sig[:, 3 * H:4 * H]

    c_t = f_t * c_prev + i_t * c_tilde
    h_t = o_t * jnp.tanh(c_t)

    out = (jnp.dot(h_t, wout_ref[...], preferred_element_type=jnp.float32)
           + bout_ref[...])

    out_ref[...] = out.astype(out_ref.dtype)
    h_out_ref[...] = h_t.astype(h_out_ref.dtype)
    c_out_ref[...] = c_t.astype(c_out_ref.dtype)


def pack_params(params):
    """Fuse gate weights ONCE at init time (pure data reshuffle, no per-step
    flops).  Gate order = f, i, C~, o; rows [:H] multiply hidden, rows [H:]
    multiply input (matching combined = cat(hidden, input))."""
    w_gates = jnp.concatenate(
        [params["w_f"], params["w_i"], params["w_c"], params["w_o"]], axis=1)
    b_gates = jnp.concatenate(
        [params["b_f"], params["b_i"], params["b_c"], params["b_o"]], axis=1)
    return {
        "w_gates": w_gates,          # (H+I, 4H)
        "b_gates": b_gates,          # (1, 4H)
        "w_out": params["w_out"],    # (H, O)
        "b_out": params["b_out"],    # (1, O)
    }


def lstm_forward(input_data, hidden_state, cell_state, packed):
    """Mirrors LSTM.forward(input_data, hidden_state, cell_state).

    `packed` is the output of pack_params(); weight packing is hoisted to
    init so the only per-step work is this single pallas_call."""
    B, I = input_data.shape
    H = hidden_state.shape[1]
    O = packed["w_out"].shape[1]

    vmem = pl.BlockSpec(memory_space=pltpu.MemorySpace.VMEM)

    flops = 2 * B * (I + H) * 4 * H + 2 * B * H * O
    transcendentals = B * (2 * 4 * H + H)   # sigmoid + tanh on full 4H, tanh(C_t)
    bytes_accessed = 4 * int(
        input_data.size + hidden_state.size + cell_state.size
        + packed["w_gates"].size + packed["b_gates"].size
        + packed["w_out"].size + packed["b_out"].size
        + B * (O + 2 * H))

    out, h_t, c_t = pl.pallas_call(
        lstm_cell_kernel,
        out_shape=(
            jax.ShapeDtypeStruct((B, O), jnp.float32),
            jax.ShapeDtypeStruct((B, H), jnp.float32),
            jax.ShapeDtypeStruct((B, H), jnp.float32),
        ),
        in_specs=[vmem] * 7,
        out_specs=(vmem, vmem, vmem),
        cost_estimate=pl.CostEstimate(
            flops=flops,
            transcendentals=transcendentals,
            bytes_accessed=bytes_accessed),
    )(input_data, hidden_state, cell_state,
      packed["w_gates"], packed["b_gates"], packed["w_out"], packed["b_out"])

    return out, h_t, c_t


def init_params(key, input_size, hidden_size, output_size):
    """Deterministic parameter init (shapes per the PyTorch module __init__).

    Each gate's nn.Linear bias is combined with the extra zero nn.Parameter
    (b_f, b_i, b_C, b_o) since they're simply added together in forward."""
    D = input_size + hidden_size
    keys = jax.random.split(key, 10)

    def linear(kw, kb, fan_in, fan_out):
        bound = 1.0 / jnp.sqrt(fan_in)
        # stored as (in, out): kernel computes x @ W
        w = jax.random.uniform(kw, (fan_in, fan_out), jnp.float32, -bound, bound)
        b = jax.random.uniform(kb, (1, fan_out), jnp.float32, -bound, bound)
        return w, b

    w_f, b_f = linear(keys[0], keys[1], D, hidden_size)
    w_i, b_i = linear(keys[2], keys[3], D, hidden_size)
    w_c, b_c = linear(keys[4], keys[5], D, hidden_size)
    w_o, b_o = linear(keys[6], keys[7], D, hidden_size)
    w_out, b_out = linear(keys[8], keys[9], hidden_size, output_size)

    zeros_h = jnp.zeros((1, hidden_size), jnp.float32)  # the explicit b_* params
    return {
        "w_f": w_f, "b_f": b_f + zeros_h,
        "w_i": w_i, "b_i": b_i + zeros_h,
        "w_c": w_c, "b_c": b_c + zeros_h,
        "w_o": w_o, "b_o": b_o + zeros_h,
        "w_out": w_out, "b_out": b_out,
    }


def lstm_reference(input_data, hidden_state, cell_state, params):
    combined = jnp.concatenate([hidden_state, input_data], axis=1)
    f_t = jax.nn.sigmoid(combined @ params["w_f"] + params["b_f"])
    i_t = jax.nn.sigmoid(combined @ params["w_i"] + params["b_i"])
    c_tilde = jnp.tanh(combined @ params["w_c"] + params["b_c"])
    c_t = f_t * cell_state + i_t * c_tilde
    o_t = jax.nn.sigmoid(combined @ params["w_o"] + params["b_o"])
    h_t = o_t * jnp.tanh(c_t)
    out = h_t @ params["w_out"] + params["b_out"]
    return out, h_t, c_t


if __name__ == "__main__":
    input_size, hidden_size, output_size = 16, 32, 8
    batch = 4

    key = jax.random.PRNGKey(0)
    k_p, k_x = jax.random.split(key)
    raw_params = init_params(k_p, input_size, hidden_size, output_size)
    # Weight packing is done ONCE here, not inside the per-step forward.
    packed = jax.tree_util.tree_map(jnp.asarray, pack_params(raw_params))

    x = jax.random.normal(k_x, (batch, input_size), jnp.float32)
    # init_hidden_and_cell
    h0 = jnp.zeros((batch, hidden_size), jnp.float32)
    c0 = jnp.zeros((batch, hidden_size), jnp.float32)

    out, h_t, c_t = lstm_forward(x, h0, c0, packed)
    jax.block_until_ready((out, h_t, c_t))

    # sanity check vs pure-JAX reference (built from the raw per-gate params)
    ref_out, ref_h, ref_c = lstm_reference(x, h0, c0, raw_params)
    assert jnp.allclose(out, ref_out, atol=1e-5), "output mismatch"
    assert jnp.allclose(h_t, ref_h, atol=1e-5), "h_t mismatch"
    assert jnp.allclose(c_t, ref_c, atol=1e-5), "C_t mismatch"

    print("KERNEL_OK")
</pallas_src>

<mosaic_0001>
module attributes {stable_mosaic.version = 11 : i64} {
  func.func @lstm_cell_kernel(%arg0: memref<4x16xf32, #tpu.memory_space<vmem>>, %arg1: memref<4x32xf32, #tpu.memory_space<vmem>>, %arg2: memref<4x32xf32, #tpu.memory_space<vmem>>, %arg3: memref<48x128xf32, #tpu.memory_space<vmem>>, %arg4: memref<1x128xf32, #tpu.memory_space<vmem>>, %arg5: memref<32x8xf32, #tpu.memory_space<vmem>>, %arg6: memref<1x8xf32, #tpu.memory_space<vmem>>, %arg7: memref<4x8xf32, #tpu.memory_space<vmem>>, %arg8: memref<4x32xf32, #tpu.memory_space<vmem>>, %arg9: memref<4x32xf32, #tpu.memory_space<vmem>>) attributes {dimension_semantics = [], scalar_prefetch = 0 : i64, scratch_operands = 0 : i64, tpu.core_type = #tpu.core_type<tc>} {
    %c0 = arith.constant 0 : index
    %c0_0 = arith.constant 0 : index
    %0 = vector.load %arg0[%c0, %c0_0] : memref<4x16xf32, #tpu.memory_space<vmem>>, vector<4x16xf32>
    %c0_1 = arith.constant 0 : index
    %c0_2 = arith.constant 0 : index
    %1 = vector.load %arg1[%c0_1, %c0_2] : memref<4x32xf32, #tpu.memory_space<vmem>>, vector<4x32xf32>
    %c0_3 = arith.constant 0 : index
    %c0_4 = arith.constant 0 : index
    %2 = vector.load %arg2[%c0_3, %c0_4] : memref<4x32xf32, #tpu.memory_space<vmem>>, vector<4x32xf32>
    %3 = tpu.concatenate %1, %0 in 1 : vector<4x32xf32>, vector<4x16xf32> -> vector<4x48xf32>
    %c0_5 = arith.constant 0 : index
    %c0_6 = arith.constant 0 : index
    %4 = vector.load %arg3[%c0_5, %c0_6] : memref<48x128xf32, #tpu.memory_space<vmem>>, vector<48x128xf32>
    %cst = arith.constant dense<0.000000e+00> : vector<4x128xf32>
    %5 = tpu.matmul %3, %4, %cst {dimension_numbers = #tpu.dot_dimension_numbers<[1], [0], [0], [1], [0, 0, 1, 1], [], []>} : vector<4x48xf32>, vector<48x128xf32>, vector<4x128xf32> -> vector<4x128xf32>
    %c0_7 = arith.constant 0 : index
    %c0_8 = arith.constant 0 : index
    %6 = vector.load %arg4[%c0_7, %c0_8] : memref<1x128xf32, #tpu.memory_space<vmem>>, vector<1x128xf32>
    %7 = vector.broadcast %6 : vector<1x128xf32> to vector<4x128xf32>
    %8 = arith.addf %5, %7 : vector<4x128xf32>
    %9 = arith.negf %8 : vector<4x128xf32>
    %10 = math.exp %9 : vector<4x128xf32>
    %cst_9 = arith.constant 1.000000e+00 : f32
    %11 = vector.broadcast %cst_9 : f32 to vector<4x128xf32>
    %12 = arith.addf %11, %10 : vector<4x128xf32>
    %13 = arith.divf %11, %12 : vector<4x128xf32>
    %14 = math.tanh %8 : vector<4x128xf32>
    %15 = vector.extract_strided_slice %13 {offsets = [0, 0], sizes = [4, 32], strides = [1, 1]} : vector<4x128xf32> to vector<4x32xf32>
    %16 = vector.extract_strided_slice %13 {offsets = [0, 32], sizes = [4, 32], strides = [1, 1]} : vector<4x128xf32> to vector<4x32xf32>
    %17 = vector.extract_strided_slice %14 {offsets = [0, 64], sizes = [4, 32], strides = [1, 1]} : vector<4x128xf32> to vector<4x32xf32>
    %18 = vector.extract_strided_slice %13 {offsets = [0, 96], sizes = [4, 32], strides = [1, 1]} : vector<4x128xf32> to vector<4x32xf32>
    %19 = arith.mulf %15, %2 : vector<4x32xf32>
    %20 = arith.mulf %16, %17 : vector<4x32xf32>
    %21 = arith.addf %19, %20 : vector<4x32xf32>
    %22 = math.tanh %21 : vector<4x32xf32>
    %23 = arith.mulf %18, %22 : vector<4x32xf32>
    %c0_10 = arith.constant 0 : index
    %c0_11 = arith.constant 0 : index
    %24 = vector.load %arg5[%c0_10, %c0_11] : memref<32x8xf32, #tpu.memory_space<vmem>>, vector<32x8xf32>
    %cst_12 = arith.constant dense<0.000000e+00> : vector<4x8xf32>
    %25 = tpu.matmul %23, %24, %cst_12 {dimension_numbers = #tpu.dot_dimension_numbers<[1], [0], [0], [1], [0, 0, 1, 1], [], []>} : vector<4x32xf32>, vector<32x8xf32>, vector<4x8xf32> -> vector<4x8xf32>
    %c0_13 = arith.constant 0 : index
    %c0_14 = arith.constant 0 : index
    %26 = vector.load %arg6[%c0_13, %c0_14] : memref<1x8xf32, #tpu.memory_space<vmem>>, vector<1x8xf32>
    %27 = vector.broadcast %26 : vector<1x8xf32> to vector<4x8xf32>
    %28 = arith.addf %25, %27 : vector<4x8xf32>
    %c0_15 = arith.constant 0 : index
    %c0_16 = arith.constant 0 : index
    %29 = vector.load %arg7[%c0_15, %c0_16] : memref<4x8xf32, #tpu.memory_space<vmem>>, vector<4x8xf32>
    tpu.vector_store %arg7[%c0_15, %c0_16], %28 {strides = array<i32>} : memref<4x8xf32, #tpu.memory_space<vmem>>, vector<4x8xf32>,
    %c0_17 = arith.constant 0 : index
    %c0_18 = arith.constant 0 : index
    %30 = vector.load %arg8[%c0_17, %c0_18] : memref<4x32xf32, #tpu.memory_space<vmem>>, vector<4x32xf32>
    tpu.vector_store %arg8[%c0_17, %c0_18], %23 {strides = array<i32>} : memref<4x32xf32, #tpu.memory_space<vmem>>, vector<4x32xf32>,
    %c0_19 = arith.constant 0 : index
    %c0_20 = arith.constant 0 : index
    %31 = vector.load %arg9[%c0_19, %c0_20] : memref<4x32xf32, #tpu.memory_space<vmem>>, vector<4x32xf32>
    tpu.vector_store %arg9[%c0_19, %c0_20], %21 {strides = array<i32>} : memref<4x32xf32, #tpu.memory_space<vmem>>, vector<4x32xf32>,
    return
  }
}

</mosaic_0001>

<llo_original>
// kernel: tpu_custom_call.1
$region0: #{tpu_custom_call.1}
  #allocation0 [shape = 'u32[]', space=smem, size = 0x4, offset = 0x4, fixed_abs, tag = 'smem constant byte address 0x4 - core index']
  #allocation1 [shape = 'u32[72,128]{1,0:T(1,128)}', space=vmem, size = 0x9000, scoped, tag = 'internal scratch']
  %s0 = inlined_call_operand.vmem [shape: f32[4,16], index: 0, kind: input, shape index: {}]
  %s1 = inlined_call_operand.vmem [shape: f32[4,32], index: 1, kind: input, shape index: {}]
  %s2 = inlined_call_operand.vmem [shape: f32[4,32], index: 2, kind: input, shape index: {}]
  %s3 = inlined_call_operand.hbm [shape: f32[48,128], index: 3, kind: input, shape index: {}]
  %s4 = inlined_call_operand.vmem [shape: f32[1,128], index: 4, kind: input, shape index: {}]
  %s5 = inlined_call_operand.vmem [shape: f32[32,8], index: 5, kind: input, shape index: {}]
  %s6 = inlined_call_operand.vmem [shape: f32[1,8], index: 6, kind: input, shape index: {}]
  %s7 = inlined_call_operand.hbm [shape: f32[4,8], index: 7, kind: output, shape index: {0}]
  %s8 = inlined_call_operand.hbm [shape: f32[4,32], index: 8, kind: output, shape index: {1}]
  %s9 = inlined_call_operand.hbm [shape: f32[4,32], index: 9, kind: output, shape index: {2}]
  %10 = xla_tuple %s7, %s8, %s9
  %s11 = sld [smem:[#allocation0]]
  $region58: #{tpu_custom_call.1} parent=0
    _
  %s13 = ssub.s32 1, %s11
  %s14 = scalar_select 0, %s13, %s11
  $region1: #{tpu_custom_call.1} parent=0
    #allocation2 [shape = 'u8[24576]{0}', space=vmem, size = 0x6000, scoped, tag = 'input window, operand 3, single buffered']
    #allocation3 [shape = 's32[1]{0}', space=sflag, size = 0x4, scoped, tag = 'scoped memory for tpu_custom_call.1']
    #allocation4 [shape = 's32[1]{0}', space=sflag, size = 0x4, scoped, tag = 'scoped memory for tpu_custom_call.1']
    #allocation5 [shape = 'u8[2048]{0}', space=vmem, size = 0x800, scoped, tag = 'output window, operand 0, single buffered']
    #allocation6 [shape = 'u8[2048]{0}', space=vmem, size = 0x800, scoped, tag = 'output window, operand 1, single buffered']
    #allocation7 [shape = 's32[1]{0}', space=sflag, size = 0x4, scoped, tag = 'scoped memory for tpu_custom_call.1']
    #allocation8 [shape = 'u8[2048]{0}', space=vmem, size = 0x800, scoped, tag = 'output window, operand 2, single buffered']
    %15 = vsyncpa [#allocation3], 0
    %16 = vsyncpa [#allocation4], 0
    %17 = vsyncpa [#allocation7], 0
    // Predicated region
    $region2: #{tpu_custom_call.1} parent=1 // pred_check
      _
    $region3: #{tpu_custom_call.1} parent=1 // pred_check_branch
      %19 = sbr.rel (0) target = $region5
    $region4: #{tpu_custom_call.1} parent=1 // pred_region
      _
    $region5: #{tpu_custom_call.1} parent=1 // pred_fallthru
      _
    // Predicated region
    $region6: #{tpu_custom_call.1} parent=1 // pred_check
      _
    $region7: #{tpu_custom_call.1} parent=1 // pred_check_branch
      %21 = sbr.rel (0) target = $region9
    $region8: #{tpu_custom_call.1} parent=1 // pred_region
      _
    $region9: #{tpu_custom_call.1} parent=1 // pred_fallthru
      _
    // Predicated region
    $region10: #{tpu_custom_call.1} parent=1 // pred_check
      _
    $region11: #{tpu_custom_call.1} parent=1 // pred_check_branch
      %23 = sbr.rel (0) target = $region13
    $region12: #{tpu_custom_call.1} parent=1 // pred_region
      _
    $region13: #{tpu_custom_call.1} parent=1 // pred_fallthru
      _
    // Predicated region
    $region14: #{tpu_custom_call.1} parent=1 // pred_check
      _
    $region15: #{tpu_custom_call.1} parent=1 // pred_check_branch
      %25 = sbr.rel (0) target = $region17
    $region16: #{tpu_custom_call.1} parent=1 // pred_region
      %27 = vsyncadd [#allocation3], 0
      %s28 = sshll.u32 %s3, 4
      %s29 = int_to_ptr.hbm [resolvable:$true] %s28
      %s30 = sshll.u32 [#allocation2], 4
      %s31 = int_to_ptr.vmem [resolvable:$true] %s30
      %36 = dma.hbm_to_vmem [thread:$0]  %s29, 768, %s31, [#allocation3], 128, 128, 8
    $region17: #{tpu_custom_call.1} parent=1 // pred_fallthru
      _
    // Predicated region
    $region18: #{tpu_custom_call.1} parent=1 // pred_check
      _
    $region19: #{tpu_custom_call.1} parent=1 // pred_check_branch
      %38 = sbr.rel (0) target = $region21
    $region20: #{tpu_custom_call.1} parent=1 // pred_region
      _
    $region21: #{tpu_custom_call.1} parent=1 // pred_fallthru
      _
    // Predicated region
    $region22: #{tpu_custom_call.1} parent=1 // pred_check
      _
    $region23: #{tpu_custom_call.1} parent=1 // pred_check_branch
      %40 = sbr.rel (0) target = $region25
    $region24: #{tpu_custom_call.1} parent=1 // pred_region
      _
    $region25: #{tpu_custom_call.1} parent=1 // pred_fallthru
      _
    // Predicated region
    $region26: #{tpu_custom_call.1} parent=1 // pred_check
      _
    $region27: #{tpu_custom_call.1} parent=1 // pred_check_branch
      %42 = sbr.rel (0) target = $region29
    $region28: #{tpu_custom_call.1} parent=1 // pred_region
      _
    $region29: #{tpu_custom_call.1} parent=1 // pred_fallthru
      _
    // Predicated region
    $region30: #{tpu_custom_call.1} parent=1 // pred_check
      _
    $region31: #{tpu_custom_call.1} parent=1 // pred_check_branch
      %44 = sbr.rel (0) target = $region33
    $region32: #{tpu_custom_call.1} parent=1 // pred_region
      %46 = dma.done [#allocation3], 768
    $region33: #{tpu_custom_call.1} parent=1 // pred_fallthru
      _
    %v47 = vld [vmem:[%s0] sm:$0xf]
    %v48 = vld [vmem:[%s1] sm:$0xf]
    %v49 = vld [vmem:[%s2] sm:$0xf]
    %51 = vrot.lane.b32.xlu0 %v47, 32
    %v52 = vpop.permute.xlu0 %51
    %vm54 = vcmask 261120
    %v55 = vsel %vm54, %v48, %v52
    %v56 = vld [vmem:[#allocation2] sm:$0xff]
    %v57 = vld [vmem:[#allocation2 + $0x8] sm:$0xff]
    %v58 = vld [vmem:[#allocation2 + $0x10] sm:$0xff]
    %v59 = vld [vmem:[#allocation2 + $0x18] sm:$0xff]
    %v60 = vld [vmem:[#allocation2 + $0x20] sm:$0xff]
    %v61 = vld [vmem:[#allocation2 + $0x28] sm:$0xff]
    %v62 = vld [vmem:[%s4] sm:$0x1]
    %v64 = vperm.slane %v62, 0
    %vm66 = vcmask 392192
    %v68 = vsel %vm66, %v55, 0
    %70 = vmatpush.msra.mxu0 0.0
    %71 = vmatpush.msra.mxu0 0.0
    %72 = vmatpush.msra.mxu0 0.0
    %73 = vmatpush.msra.mxu0 0.0
    %74 = vmatpush.msra.mxu0 0.0
    %75 = vmatpush.msra.mxu0 0.0
    %76 = vmatpush.msra.mxu0 0.0
    %77 = vmatpush.msra.mxu0 0.0
    %78 = vmatpush.msra.mxu0 0.0
    %79 = vmatpush.msra.mxu0 0.0
    %80 = vmatpush.msra.mxu0 %v61
    %81 = vmatpush.msra.mxu0 %v60
    %82 = vmatpush.msra.mxu0 %v59
    %83 = vmatpush.msra.mxu0 %v58
    %84 = vmatpush.msra.mxu0 %v57
    %85 = vmatpush.msra.mxu0 %v56
    %86 = vmatmul.f32.gmra.mxu0 %v68
    %v87 = vpop.f32.mrf.mxu0
    %v88 = vadd.f32 %v64, %v87
    %89 = vdwg.mxu0
    %v90 = vxor.u32 %v88, 2147483648
    %v91 = vmul.f32 %v90, 1.442695
    %v92 = vpow.pop %v91
    %v93 = vadd.f32 %v92, 1.0
    %v94 = vrcp.pop %v93
    %v95 = vmul.f32 %v93, %v94
    %v96 = vsub.f32 1.0, %v95
    %v97 = vmul.f32 %v94, %v96
    %v98 = vadd.f32 %v94, %v97
    %vm99 = vweird.f32 %v93
    %vm100 = vweird.f32 %v94
    %vm101 = vmor %vm99, %vm100
    %v102 = vsel %vm101, %v94, %v98
    %v103 = vand.u32 2147483647, %v93
    %vm104 = vcmp.eq.f32.partialorder %v103, 8.507059e+37
    %v105 = vand.u32 %v93, 2147483648
    %v106 = vor.u32 1.1754944e-38, %v105
    %v107 = vsel %vm104, %v106, %v102
    %v108 = vmul.f32 1.0, %v107
    %v109 = vtanh.pop %v88
    %v110 = vmul.f32 %v108, %v49
    %112 = vrot.lane.b32.xlu0 %v109, 96
    %v113 = vpop.permute.xlu0 %112
    %v115 = vmul.f32 %v108, %v113
    %117 = vrot.lane.b32.xlu0 %v115, 96
    %v118 = vpop.permute.xlu0 %117
    %v120 = vadd.f32 %v110, %v118
    %v121 = vtanh.pop %v120
    %123 = vrot.lane.b32.xlu0 %v121, 96
    %v124 = vpop.permute.xlu0 %123
    %v126 = vmul.f32 %v108, %v124
    %v127 = vld [vmem:[%s5] sm:$0xff]
    %v128 = vld [vmem:[%s5 + $0x8] sm:$0xff]
    %v129 = vld [vmem:[%s5 + $0x10] sm:$0xff]
    %v130 = vld [vmem:[%s5 + $0x18] sm:$0xff]
    %v131 = vld [vmem:[%s6] sm:$0x1]
    %v133 = vperm.slane %v131, 0
    %136 = vrot.lane.b32.xlu0 %v126, 32
    %v137 = vpop.permute.xlu0 %136
    %v138 = vsel %vm54, %v137, 0
    %140 = vmatpush.msra.mxu0 0.0
    %141 = vmatpush.msra.mxu0 0.0
    %142 = vmatpush.msra.mxu0 0.0
    %143 = vmatpush.msra.mxu0 0.0
    %144 = vmatpush.msra.mxu0 0.0
    %145 = vmatpush.msra.mxu0 0.0
    %146 = vmatpush.msra.mxu0 0.0
    %147 = vmatpush.msra.mxu0 0.0
    %148 = vmatpush.msra.mxu0 0.0
    %149 = vmatpush.msra.mxu0 0.0
    %150 = vmatpush.msra.mxu0 0.0
    %151 = vmatpush.msra.mxu0 0.0
    %152 = vmatpush.msra.mxu0 %v130
    %153 = vmatpush.msra.mxu0 %v129
    %154 = vmatpush.msra.mxu0 %v128
    %155 = vmatpush.msra.mxu0 %v127
    %156 = vmatmul.f32.gmra.mxu0 %v138
    %v157 = vpop.f32.mrf.mxu0
    %v158 = vadd.f32 %v133, %v157
    %159 = vdwg.mxu0
    %vm160 = vcmask 60416
    %161 = vst.msk [vmem:[#allocation5] sm:$0xf] %vm160, %v158
    %vm163 = vcmask 257024
    %164 = vst.msk [vmem:[#allocation6] sm:$0xf] %vm163, %v137
    %165 = vst.msk [vmem:[#allocation8] sm:$0xf] %vm163, %v120
    // Predicated region
    $region34: #{tpu_custom_call.1} parent=1 // pred_check
      _
    $region35: #{tpu_custom_call.1} parent=1 // pred_check_branch
      %167 = sbr.rel (0) target = $region37
    $region36: #{tpu_custom_call.1} parent=1 // pred_region
      %169 = vsyncadd [#allocation4], 0
      %s171 = sshll.u32 [#allocation5], 4
      %s172 = int_to_ptr.vmem [resolvable:$true] %s171
      %s173 = sshll.u32 %s7, 4
      %s174 = int_to_ptr.hbm [resolvable:$true] %s173
      %176 = dma.vmem_to_hbm [thread:$0]  %s172, 64, %s174, [#allocation4]
    $region37: #{tpu_custom_call.1} parent=1 // pred_fallthru
      _
    // Predicated region
    $region38: #{tpu_custom_call.1} parent=1 // pred_check
      _
    $region39: #{tpu_custom_call.1} parent=1 // pred_check_branch
      %178 = sbr.rel (0) target = $region41
    $region40: #{tpu_custom_call.1} parent=1 // pred_region
      %180 = vsyncadd [#allocation7], 0
      %s182 = sshll.u32 [#allocation6], 4
      %s183 = int_to_ptr.vmem [resolvable:$true] %s182
      %s184 = sshll.u32 %s8, 4
      %s185 = int_to_ptr.hbm [resolvable:$true] %s184
      %187 = dma.vmem_to_hbm [thread:$0]  %s183, 64, %s185, [#allocation7]
    $region41: #{tpu_custom_call.1} parent=1 // pred_fallthru
      _
    // Predicated region
    $region42: #{tpu_custom_call.1} parent=1 // pred_check
      _
    $region43: #{tpu_custom_call.1} parent=1 // pred_check_branch
      %189 = sbr.rel (0) target = $region45
    $region44: #{tpu_custom_call.1} parent=1 // pred_region
      %191 = vsyncadd [#allocation7], 0
      %s193 = sshll.u32 [#allocation8], 4
      %s194 = int_to_ptr.vmem [resolvable:$true] %s193
      %s195 = sshll.u32 %s9, 4
      %s196 = int_to_ptr.hbm [resolvable:$true] %s195
      %198 = dma.vmem_to_hbm [thread:$0]  %s194, 64, %s196, [#allocation7]
    $region45: #{tpu_custom_call.1} parent=1 // pred_fallthru
      _
    // Predicated region
    $region46: #{tpu_custom_call.1} parent=1 // pred_check
      _
    $region47: #{tpu_custom_call.1} parent=1 // pred_check_branch
      %200 = sbr.rel (0) target = $region49
    $region48: #{tpu_custom_call.1} parent=1 // pred_region
      %202 = dma.done [#allocation4], 64
    $region49: #{tpu_custom_call.1} parent=1 // pred_fallthru
      _
    // Predicated region
    $region50: #{tpu_custom_call.1} parent=1 // pred_check
      _
    $region51: #{tpu_custom_call.1} parent=1 // pred_check_branch
      %204 = sbr.rel (0) target = $region53
    $region52: #{tpu_custom_call.1} parent=1 // pred_region
      %206 = dma.done [#allocation7], 64
    $region53: #{tpu_custom_call.1} parent=1 // pred_fallthru
      _
    // Predicated region
    $region54: #{tpu_custom_call.1} parent=1 // pred_check
      _
    $region55: #{tpu_custom_call.1} parent=1 // pred_check_branch
      %208 = sbr.rel (0) target = $region57
    $region56: #{tpu_custom_call.1} parent=1 // pred_region
      %210 = dma.done [#allocation7], 64
    $region57: #{tpu_custom_call.1} parent=1 // pred_fallthru
      _
    %211 = vsyncpa [#allocation3], 1
    %212 = vsyncpa [#allocation4], 1
    %213 = vsyncpa [#allocation7], 1

</llo_original>
